<compile_context>
chip_gen: v6e
topology: v6e:2x2x1
jax: 0.10.0
libtpu: 0.0.40
codegen_flags: <defaults>
</compile_context>

<pallas_src>
import jax
import jax.numpy as jnp
from jax.experimental import pallas as pl
from jax.experimental.pallas import tpu as pltpu

_LANE = 128

# Sublane-padding-aware VMEM bytes per batch lane of the tile:
#   x block (2->8 sublanes, f32, double-buffered)      ~  64 B
#   out block (1->8 sublanes, f32, double-buffered)    ~  64 B
#   h1/h2 f32 intermediates (10->16 sublanes each)     ~ 128 B
#   bf16 temporaries of x/h1/h2 + h3                   ~ 112 B
_BYTES_PER_LANE = 384
_VMEM_BLOCK_BUDGET = 24 * 1024 * 1024          # headroom under the 32 MiB scoped limit
_VMEM_LIMIT_BYTES = 32 * 1024 * 1024           # safe default on v5e/v6e/v7x


def _round_up(n, m):
    return ((n + m - 1) // m) * m


def circle_mlp_kernel(x_ref, w1_ref, b1_ref, w2_ref, b2_ref, w3_ref, b3_ref, o_ref):
    # Feature-major: x is (2, TB), output is (1, TB).
    # Matmul inputs in bf16 (weights arrive pre-cast), accumulate in f32 on the
    # MXU; bias-add + ReLU run on the VPU (slack under the MXU-bound steady state).
    x = x_ref[...].astype(jnp.bfloat16)                                   # (2,  TB)

    h1 = jnp.dot(w1_ref[...], x, preferred_element_type=jnp.float32)
    h1 = jnp.maximum(h1 + b1_ref[...], 0.0)                               # (10, TB) f32

    h2 = jnp.dot(w2_ref[...], h1.astype(jnp.bfloat16),
                 preferred_element_type=jnp.float32)
    h2 = jnp.maximum(h2 + b2_ref[...], 0.0)                               # (10, TB) f32

    h3 = jnp.dot(w3_ref[...], h2.astype(jnp.bfloat16),
                 preferred_element_type=jnp.float32)
    h3 = jnp.maximum(h3 + b3_ref[...], 0.0)                               # (1,  TB) f32

    o_ref[...] = h3.astype(o_ref.dtype)


def circle_model_forward_pallas(x, params, *, batch_tile=65536):
    """x: (B, 2) float32.  params use PyTorch layout: w_i (out,in), b_i (out,1)."""
    B = x.shape[0]
    w1, b1 = params["w1"], params["b1"]
    w2, b2 = params["w2"], params["b2"]
    w3, b3 = params["w3"], params["b3"]

    # ---- tile sizing (lane-dense, padding-aware, megacore-friendly) ----
    bp0 = _round_up(max(B, 1), _LANE)                      # batch rounded to a lane tile
    tb = _round_up(min(batch_tile, bp0), _LANE)
    # Keep >= 2 grid steps whenever possible so the "parallel" axis feeds both
    # TensorCores on v7x (harmless single-core elsewhere).
    if bp0 >= 2 * _LANE:
        tb = min(tb, max(_LANE, (bp0 // 2) // _LANE * _LANE))
    # Cap by sublane-padded VMEM usage, not logical block bytes.
    tb_vmem_cap = max(_LANE, (_VMEM_BLOCK_BUDGET // _BYTES_PER_LANE) // _LANE * _LANE)
    tb = min(tb, tb_vmem_cap)
    bp = _round_up(bp0, tb)
    n_tiles = bp // tb

    # ---- wrapper-side prep ----
    # Single fused transpose+pad of x into feature-major (2, Bp); padded lanes
    # compute relu(bias) garbage and are sliced off below.
    xt = jnp.pad(x.astype(jnp.float32).T, ((0, 0), (0, bp - B)))
    # Weights cast to bf16 once here; biases stay f32 (added post-accumulation).
    w1b = w1.astype(jnp.bfloat16)
    w2b = w2.astype(jnp.bfloat16)
    w3b = w3.astype(jnp.bfloat16)
    b1f = b1.astype(jnp.float32)
    b2f = b2.astype(jnp.float32)
    b3f = b3.astype(jnp.float32)

    # Weights/biases: full-array blocks with constant index_map -> VMEM-resident.
    resident = lambda a: pl.BlockSpec(a.shape, lambda i: (0, 0))

    # Advisory cost estimate (consistent: everything in padded-batch units).
    flops = 2 * bp * (2 * 10 + 10 * 10 + 10 * 1)
    bytes_accessed = (
        4 * 2 * bp + 4 * 1 * bp                                   # x in, y out (f32)
        + 2 * (w1b.size + w2b.size + w3b.size)                    # bf16 weights
        + 4 * (b1f.size + b2f.size + b3f.size)                    # f32 biases
    )

    out = pl.pallas_call(
        circle_mlp_kernel,
        out_shape=jax.ShapeDtypeStruct((1, bp), jnp.float32),
        grid=(n_tiles,),
        in_specs=[
            pl.BlockSpec((2, tb), lambda i: (0, i)),   # x streamed over batch
            resident(w1b), resident(b1f),
            resident(w2b), resident(b2f),
            resident(w3b), resident(b3f),
        ],
        out_specs=pl.BlockSpec((1, tb), lambda i: (0, i)),
        compiler_params=pltpu.CompilerParams(
            dimension_semantics=("parallel",),          # megacore sharding on v7x
            vmem_limit_bytes=_VMEM_LIMIT_BYTES,
        ),
        cost_estimate=pl.CostEstimate(
            flops=flops, transcendentals=0, bytes_accessed=bytes_accessed
        ),
    )(xt, w1b, b1f, w2b, b2f, w3b, b3f)

    return out[:, :B].T                                 # back to (B, 1)


def reference_forward(x, p, matmul_dtype=jnp.float32):
    """Pure-JAX reference with PyTorch-layout params.

    matmul_dtype=jnp.bfloat16 mirrors the kernel's mixed-precision matmuls
    (bf16 inputs, f32 accumulation); float32 matches the PyTorch module exactly.
    """
    def lin_relu(a, w, b):
        y = jnp.dot(a.astype(matmul_dtype), w.astype(matmul_dtype).T,
                    preferred_element_type=jnp.float32)
        return jnp.maximum(y + b.T, 0.0)

    y1 = lin_relu(x.astype(jnp.float32), p["w1"], p["b1"])
    y2 = lin_relu(y1, p["w2"], p["b2"])
    y3 = lin_relu(y2, p["w3"], p["b3"])
    return y3


def circle_model_forward(x, params, *, min_pallas_batch=8192):
    """Dispatch: below ~one batch tile the pallas_call launch + padding overhead
    loses to plain XLA, so fall back there (full-f32 path)."""
    if x.shape[0] < min_pallas_batch:
        return reference_forward(x, params)
    return circle_model_forward_pallas(x, params)


def init_params(key):
    """PyTorch nn.Linear default init, stored in PyTorch-native layout:
    w: (out_features, in_features), b: (out_features, 1)."""
    def linear(k, fan_in, fan_out):
        kw, kb = jax.random.split(k)
        bound = 1.0 / jnp.sqrt(fan_in)
        w = jax.random.uniform(kw, (fan_out, fan_in), jnp.float32, -bound, bound)
        b = jax.random.uniform(kb, (fan_out, 1), jnp.float32, -bound, bound)
        return w, b

    k1, k2, k3 = jax.random.split(key, 3)
    w1, b1 = linear(k1, 2, 10)
    w2, b2 = linear(k2, 10, 10)
    w3, b3 = linear(k3, 10, 1)
    return {"w1": w1, "b1": b1, "w2": w2, "b2": b2, "w3": w3, "b3": b3}


if __name__ == "__main__":
    key = jax.random.PRNGKey(0)
    kx, kp = jax.random.split(key)
    params = init_params(kp)

    # Small shape consistent with the module (CircleModel takes (B, 2) points).
    B = 8
    x = jax.random.normal(kx, (B, 2), dtype=jnp.float32)

    out = circle_model_forward_pallas(x, params)        # force the kernel path
    out = jax.block_until_ready(out)
    assert out.shape == (B, 1)
    # Tight check vs a bf16-matmul-matched reference, loose check vs full f32.
    ref_bf16 = reference_forward(x, params, matmul_dtype=jnp.bfloat16)
    ref_f32 = reference_forward(x, params, matmul_dtype=jnp.float32)
    assert jnp.allclose(out, ref_bf16, atol=1e-3, rtol=1e-3)
    assert jnp.allclose(out, ref_f32, atol=5e-2, rtol=5e-2)

    # Exercise the multi-tile grid + batch padding path (still tiny/fast).
    B2 = 300
    x2 = jax.random.normal(jax.random.PRNGKey(1), (B2, 2), dtype=jnp.float32)
    out2 = jax.block_until_ready(
        circle_model_forward_pallas(x2, params, batch_tile=128)
    )
    assert out2.shape == (B2, 1)
    ref2_bf16 = reference_forward(x2, params, matmul_dtype=jnp.bfloat16)
    ref2_f32 = reference_forward(x2, params, matmul_dtype=jnp.float32)
    assert jnp.allclose(out2, ref2_bf16, atol=1e-3, rtol=1e-3)
    assert jnp.allclose(out2, ref2_f32, atol=5e-2, rtol=5e-2)

    print("KERNEL_OK")
</pallas_src>

<mosaic_0001>
module attributes {stable_mosaic.version = 11 : i64} {
  func.func @circle_mlp_kernel(%arg0: i32, %arg1: memref<2x128xf32, #tpu.memory_space<vmem>>, %arg2: memref<10x2xbf16, #tpu.memory_space<vmem>>, %arg3: memref<10x1xf32, #tpu.memory_space<vmem>>, %arg4: memref<10x10xbf16, #tpu.memory_space<vmem>>, %arg5: memref<10x1xf32, #tpu.memory_space<vmem>>, %arg6: memref<1x10xbf16, #tpu.memory_space<vmem>>, %arg7: memref<1x1xf32, #tpu.memory_space<vmem>>, %arg8: memref<1x128xf32, #tpu.memory_space<vmem>>) attributes {dimension_semantics = [#tpu.dimension_semantics<parallel>], iteration_bounds = array<i64: 1>, scalar_prefetch = 0 : i64, scratch_operands = 0 : i64, tpu.core_type = #tpu.core_type<tc>, window_params = [{transform_indices = @transform_0, window_bounds = array<i64: 2, 128>}, {pipeline_mode = #tpu.pipeline_mode<synchronous>, transform_indices = @transform_1, window_bounds = array<i64: 10, 2>}, {pipeline_mode = #tpu.pipeline_mode<synchronous>, transform_indices = @transform_2, window_bounds = array<i64: 10, 1>}, {pipeline_mode = #tpu.pipeline_mode<synchronous>, transform_indices = @transform_3, window_bounds = array<i64: 10, 10>}, {pipeline_mode = #tpu.pipeline_mode<synchronous>, transform_indices = @transform_4, window_bounds = array<i64: 10, 1>}, {pipeline_mode = #tpu.pipeline_mode<synchronous>, transform_indices = @transform_5, window_bounds = array<i64: 1, 10>}, {pipeline_mode = #tpu.pipeline_mode<synchronous>, transform_indices = @transform_6, window_bounds = array<i64: 1, 1>}, {transform_indices = @transform_7, window_bounds = array<i64: 1, 128>}]} {
    %c0 = arith.constant 0 : index
    %c0_0 = arith.constant 0 : index
    %0 = vector.load %arg1[%c0, %c0_0] : memref<2x128xf32, #tpu.memory_space<vmem>>, vector<2x128xf32>
    %1 = arith.truncf %0 : vector<2x128xf32> to vector<2x128xbf16>
    %c0_1 = arith.constant 0 : index
    %c0_2 = arith.constant 0 : index
    %2 = vector.load %arg2[%c0_1, %c0_2] : memref<10x2xbf16, #tpu.memory_space<vmem>>, vector<10x2xbf16>
    %cst = arith.constant dense<0.000000e+00> : vector<10x128xf32>
    %3 = tpu.matmul %2, %1, %cst {dimension_numbers = #tpu.dot_dimension_numbers<[1], [0], [0], [1], [0, 0, 1, 1], [], []>} : vector<10x2xbf16>, vector<2x128xbf16>, vector<10x128xf32> -> vector<10x128xf32>
    %c0_3 = arith.constant 0 : index
    %c0_4 = arith.constant 0 : index
    %4 = vector.load %arg3[%c0_3, %c0_4] : memref<10x1xf32, #tpu.memory_space<vmem>>, vector<10x1xf32>
    %5 = vector.broadcast %4 : vector<10x1xf32> to vector<10x128xf32>
    %6 = arith.addf %3, %5 : vector<10x128xf32>
    %cst_5 = arith.constant 0.000000e+00 : f32
    %7 = vector.broadcast %cst_5 : f32 to vector<10x128xf32>
    %8 = arith.maximumf %6, %7 : vector<10x128xf32>
    %c0_6 = arith.constant 0 : index
    %c0_7 = arith.constant 0 : index
    %9 = vector.load %arg4[%c0_6, %c0_7] : memref<10x10xbf16, #tpu.memory_space<vmem>>, vector<10x10xbf16>
    %10 = arith.truncf %8 : vector<10x128xf32> to vector<10x128xbf16>
    %cst_8 = arith.constant dense<0.000000e+00> : vector<10x128xf32>
    %11 = tpu.matmul %9, %10, %cst_8 {dimension_numbers = #tpu.dot_dimension_numbers<[1], [0], [0], [1], [0, 0, 1, 1], [], []>} : vector<10x10xbf16>, vector<10x128xbf16>, vector<10x128xf32> -> vector<10x128xf32>
    %c0_9 = arith.constant 0 : index
    %c0_10 = arith.constant 0 : index
    %12 = vector.load %arg5[%c0_9, %c0_10] : memref<10x1xf32, #tpu.memory_space<vmem>>, vector<10x1xf32>
    %13 = vector.broadcast %12 : vector<10x1xf32> to vector<10x128xf32>
    %14 = arith.addf %11, %13 : vector<10x128xf32>
    %cst_11 = arith.constant 0.000000e+00 : f32
    %15 = vector.broadcast %cst_11 : f32 to vector<10x128xf32>
    %16 = arith.maximumf %14, %15 : vector<10x128xf32>
    %c0_12 = arith.constant 0 : index
    %c0_13 = arith.constant 0 : index
    %17 = vector.load %arg6[%c0_12, %c0_13] : memref<1x10xbf16, #tpu.memory_space<vmem>>, vector<1x10xbf16>
    %18 = arith.truncf %16 : vector<10x128xf32> to vector<10x128xbf16>
    %cst_14 = arith.constant dense<0.000000e+00> : vector<1x128xf32>
    %19 = tpu.matmul %17, %18, %cst_14 {dimension_numbers = #tpu.dot_dimension_numbers<[1], [0], [0], [1], [0, 0, 1, 1], [], []>} : vector<1x10xbf16>, vector<10x128xbf16>, vector<1x128xf32> -> vector<1x128xf32>
    %c0_15 = arith.constant 0 : index
    %c0_16 = arith.constant 0 : index
    %20 = vector.load %arg7[%c0_15, %c0_16] : memref<1x1xf32, #tpu.memory_space<vmem>>, vector<1x1xf32>
    %21 = vector.broadcast %20 : vector<1x1xf32> to vector<1x128xf32>
    %22 = arith.addf %19, %21 : vector<1x128xf32>
    %cst_17 = arith.constant 0.000000e+00 : f32
    %23 = vector.broadcast %cst_17 : f32 to vector<1x128xf32>
    %24 = arith.maximumf %22, %23 : vector<1x128xf32>
    %c0_18 = arith.constant 0 : index
    %c0_19 = arith.constant 0 : index
    %25 = vector.load %arg8[%c0_18, %c0_19] : memref<1x128xf32, #tpu.memory_space<vmem>>, vector<1x128xf32>
    tpu.vector_store %arg8[%c0_18, %c0_19], %24 {strides = array<i32>} : memref<1x128xf32, #tpu.memory_space<vmem>>, vector<1x128xf32>,
    return
  }
  func.func @transform_0(%arg0: i32) -> (i32, i32) {
    %c0_i32 = arith.constant 0 : i32
    %c0_i32_0 = arith.constant 0 : i32
    return %c0_i32, %arg0 : i32, i32
  }
  func.func @transform_1(%arg0: i32) -> (i32, i32) {
    %c0_i32 = arith.constant 0 : i32
    %c0_i32_0 = arith.constant 0 : i32
    %c0_i32_1 = arith.constant 0 : i32
    return %c0_i32, %c0_i32_0 : i32, i32
  }
  func.func @transform_2(%arg0: i32) -> (i32, i32) {
    %c0_i32 = arith.constant 0 : i32
    %c0_i32_0 = arith.constant 0 : i32
    %c0_i32_1 = arith.constant 0 : i32
    return %c0_i32, %c0_i32_0 : i32, i32
  }
  func.func @transform_3(%arg0: i32) -> (i32, i32) {
    %c0_i32 = arith.constant 0 : i32
    %c0_i32_0 = arith.constant 0 : i32
    %c0_i32_1 = arith.constant 0 : i32
    return %c0_i32, %c0_i32_0 : i32, i32
  }
  func.func @transform_4(%arg0: i32) -> (i32, i32) {
    %c0_i32 = arith.constant 0 : i32
    %c0_i32_0 = arith.constant 0 : i32
    %c0_i32_1 = arith.constant 0 : i32
    return %c0_i32, %c0_i32_0 : i32, i32
  }
  func.func @transform_5(%arg0: i32) -> (i32, i32) {
    %c0_i32 = arith.constant 0 : i32
    %c0_i32_0 = arith.constant 0 : i32
    %c0_i32_1 = arith.constant 0 : i32
    return %c0_i32, %c0_i32_0 : i32, i32
  }
  func.func @transform_6(%arg0: i32) -> (i32, i32) {
    %c0_i32 = arith.constant 0 : i32
    %c0_i32_0 = arith.constant 0 : i32
    %c0_i32_1 = arith.constant 0 : i32
    return %c0_i32, %c0_i32_0 : i32, i32
  }
  func.func @transform_7(%arg0: i32) -> (i32, i32) {
    %c0_i32 = arith.constant 0 : i32
    %c0_i32_0 = arith.constant 0 : i32
    return %c0_i32, %arg0 : i32, i32
  }
}

</mosaic_0001>

<llo_original>
// kernel: tpu_custom_call.1
$region0: #{tpu_custom_call.1}
  #allocation0 [shape = 'u32[]', space=smem, size = 0x4, offset = 0x4, fixed_abs, tag = 'smem constant byte address 0x4 - core index']
  #allocation1 [shape = 'u32[144,128]{1,0:T(1,128)}', space=vmem, size = 0x12000, scoped, tag = 'internal scratch']
  #allocation2 [shape = 'f32[1,1]{1,0:T(1,128)S(1)}', space=vmem, size = 0x200, scoped, tag = 'scoped memory for tpu_custom_call.1']
  %s0 = inlined_call_operand.vmem [shape: f32[2,128], index: 0, kind: input, shape index: {}]
  %s1 = inlined_call_operand.vmem [shape: bf16[10,2], index: 1, kind: input, shape index: {}]
  %s2 = inlined_call_operand.vmem [shape: f32[10,1], index: 2, kind: input, shape index: {}]
  %s3 = inlined_call_operand.vmem [shape: bf16[10,10], index: 3, kind: input, shape index: {}]
  %s4 = inlined_call_operand.vmem [shape: f32[10,1], index: 4, kind: input, shape index: {}]
  %s5 = inlined_call_operand.vmem [shape: bf16[1,10], index: 5, kind: input, shape index: {}]
  %s6 = inlined_call_operand.<no memory space> [shape: f32[1,1], index: 6, kind: input, shape index: {}]
  %s7 = inlined_call_operand.hbm [shape: f32[1,128], index: 7, kind: output, shape index: {}]
  %s8 = sld [smem:[#allocation0]]
  $region38: #{tpu_custom_call.1} parent=0
    _
  %s10 = ssub.s32 1, %s8
  %s11 = scalar_select 0, %s10, %s8
  %v12 = vstv %s6
  %13 = vst [vmem:[#allocation2] sm:$0x1] %v12
  $region1: #{tpu_custom_call.1} parent=0
    #allocation3 [shape = 'u8[512]{0}', space=vmem, size = 0x400, scoped, tag = 'output window, operand 0, single buffered']
    #allocation4 [shape = 's32[1]{0}', space=sflag, size = 0x4, scoped, tag = 'scoped memory for tpu_custom_call.1']
    %14 = vsyncpa [#allocation4], 0
    // Predicated region
    $region2: #{tpu_custom_call.1} parent=1 // pred_check
      _
    $region3: #{tpu_custom_call.1} parent=1 // pred_check_branch
      %16 = sbr.rel (0) target = $region5
    $region4: #{tpu_custom_call.1} parent=1 // pred_region
      _
    $region5: #{tpu_custom_call.1} parent=1 // pred_fallthru
      _
    // Predicated region
    $region6: #{tpu_custom_call.1} parent=1 // pred_check
      _
    $region7: #{tpu_custom_call.1} parent=1 // pred_check_branch
      %18 = sbr.rel (0) target = $region9
    $region8: #{tpu_custom_call.1} parent=1 // pred_region
      _
    $region9: #{tpu_custom_call.1} parent=1 // pred_fallthru
      _
    // Predicated region
    $region10: #{tpu_custom_call.1} parent=1 // pred_check
      _
    $region11: #{tpu_custom_call.1} parent=1 // pred_check_branch
      %20 = sbr.rel (0) target = $region13
    $region12: #{tpu_custom_call.1} parent=1 // pred_region
      _
    $region13: #{tpu_custom_call.1} parent=1 // pred_fallthru
      _
    // Predicated region
    $region14: #{tpu_custom_call.1} parent=1 // pred_check
      _
    $region15: #{tpu_custom_call.1} parent=1 // pred_check_branch
      %22 = sbr.rel (0) target = $region17
    $region16: #{tpu_custom_call.1} parent=1 // pred_region
      _
    $region17: #{tpu_custom_call.1} parent=1 // pred_fallthru
      _
    // Predicated region
    $region18: #{tpu_custom_call.1} parent=1 // pred_check
      _
    $region19: #{tpu_custom_call.1} parent=1 // pred_check_branch
      %24 = sbr.rel (0) target = $region21
    $region20: #{tpu_custom_call.1} parent=1 // pred_region
      _
    $region21: #{tpu_custom_call.1} parent=1 // pred_fallthru
      _
    // Predicated region
    $region22: #{tpu_custom_call.1} parent=1 // pred_check
      _
    $region23: #{tpu_custom_call.1} parent=1 // pred_check_branch
      %26 = sbr.rel (0) target = $region25
    $region24: #{tpu_custom_call.1} parent=1 // pred_region
      _
    $region25: #{tpu_custom_call.1} parent=1 // pred_fallthru
      _
    // Predicated region
    $region26: #{tpu_custom_call.1} parent=1 // pred_check
      _
    $region27: #{tpu_custom_call.1} parent=1 // pred_check_branch
      %28 = sbr.rel (0) target = $region29
    $region28: #{tpu_custom_call.1} parent=1 // pred_region
      _
    $region29: #{tpu_custom_call.1} parent=1 // pred_fallthru
      _
    %v30 = vld [vmem:[%s0] sm:$0x3]
    %v31 = vpack.c.bf16 %v30, %v30
    %v32 = vld [vmem:[%s1] sm:$0xf]
    %v33 = vld [vmem:[%s1 + $0x4] sm:$0x1]
    %v34 = vld [vmem:[%s2] sm:$0xff]
    %v35 = vld [vmem:[%s2 + $0x8] sm:$0x3]
    %37 = vset.pattern.permute.xlu0 0
    %38 = vperm.xlu0 %37, %v34
    %v39 = vpop.permute.xlu0 %38
    %42 = vset.pattern.permute.xlu0 0
    %43 = vperm.xlu0 %42, %v35
    %v44 = vpop.permute.xlu0 %43
    %v48 = vunpack.c.l.b16 %v32
    %v49 = vunpack.c.l.b16 %v33
    %v50 = vpack.c.b16 %v49, %v48
    %vm51 = vcmask 15360
    %v53 = vsel %vm51, %v50, 0
    %vm55 = vcmask 1040384
    %v57 = vsel %vm55, %v31, 0
    %59 = vmatprep.subr.bf16.mxu0 0
    %60 = vmatpush1.bf16.msra.mxu0 0
    %61 = vmatprep.subr.bf16.mxu0 0
    %62 = vmatpush1.bf16.msra.mxu0 0
    %63 = vmatprep.subr.bf16.mxu0 0
    %64 = vmatpush1.bf16.msra.mxu0 0
    %65 = vmatprep.subr.bf16.mxu0 0
    %66 = vmatpush1.bf16.msra.mxu0 0
    %67 = vmatprep.subr.bf16.mxu0 0
    %68 = vmatpush1.bf16.msra.mxu0 0
    %69 = vmatprep.subr.bf16.mxu0 0
    %70 = vmatpush1.bf16.msra.mxu0 0
    %71 = vmatprep.subr.bf16.mxu0 0
    %72 = vmatpush1.bf16.msra.mxu0 0
    %73 = vmatprep.subr.bf16.mxu0 0
    %74 = vmatpush1.bf16.msra.mxu0 %v57
    %75 = vmatprep.subr.bf16.mxu0 0
    %76 = vmatpush2.bf16.msra.mxu0 0
    %77 = vmatprep.subr.bf16.mxu0 0
    %78 = vmatpush2.bf16.msra.mxu0 0
    %79 = vmatprep.subr.bf16.mxu0 0
    %80 = vmatpush2.bf16.msra.mxu0 0
    %81 = vmatprep.subr.bf16.mxu0 0
    %82 = vmatpush2.bf16.msra.mxu0 0
    %83 = vmatprep.subr.bf16.mxu0 0
    %84 = vmatpush2.bf16.msra.mxu0 0
    %85 = vmatprep.subr.bf16.mxu0 0
    %86 = vmatpush2.bf16.msra.mxu0 0
    %87 = vmatprep.subr.bf16.mxu0 0
    %88 = vmatpush2.bf16.msra.mxu0 0
    %89 = vmatprep.subr.bf16.mxu0 0
    %90 = vmatpush2.bf16.msra.mxu0 0
    %91 = vmatprep.mubr.bf16.mxu0 0
    %92 = vmatmul.mubr.bf16.gmra.mxu0 %v53
    %v93 = vpop.f32.mrf.mxu0
    %v94 = vadd.f32 %v39, %v93
    %v95 = vpop.f32.mrf.mxu0
    %v96 = vpop.f32.mrf.mxu0
    %v97 = vadd.f32 %v44, %v96
    %v98 = vpop.f32.mrf.mxu0
    %99 = vdwg.mxu0
    %v100 = vmax.f32 %v94, 0.0
    %v101 = vmax.f32 %v97, 0.0
    %v102 = vld [vmem:[%s3] sm:$0xf]
    %v103 = vld [vmem:[%s3 + $0x4] sm:$0x1]
    %v104 = vpack.c.bf16 %v101, %v100
    %v105 = vld [vmem:[%s4] sm:$0xff]
    %v106 = vld [vmem:[%s4 + $0x8] sm:$0x3]
    %108 = vset.pattern.permute.xlu0 0
    %109 = vperm.xlu0 %108, %v105
    %v110 = vpop.permute.xlu0 %109
    %113 = vset.pattern.permute.xlu0 0
    %114 = vperm.xlu0 %113, %v106
    %v115 = vpop.permute.xlu0 %114
    %v119 = vunpack.c.l.b16 %v102
    %v120 = vunpack.c.l.b16 %v103
    %v121 = vpack.c.b16 %v120, %v119
    %vm122 = vcmask 80896
    %v124 = vsel %vm122, %v121, 0
    %vm126 = vcmask 1044480
    %v128 = vsel %vm126, %v104, 0
    %130 = vmatprep.subr.bf16.mxu0 0
    %131 = vmatpush1.bf16.msra.mxu0 0
    %132 = vmatprep.subr.bf16.mxu0 0
    %133 = vmatpush1.bf16.msra.mxu0 0
    %134 = vmatprep.subr.bf16.mxu0 0
    %135 = vmatpush1.bf16.msra.mxu0 0
    %136 = vmatprep.subr.bf16.mxu0 0
    %137 = vmatpush1.bf16.msra.mxu0 0
    %138 = vmatprep.subr.bf16.mxu0 0
    %139 = vmatpush1.bf16.msra.mxu0 0
    %140 = vmatprep.subr.bf16.mxu0 0
    %141 = vmatpush1.bf16.msra.mxu0 0
    %142 = vmatprep.subr.bf16.mxu0 0
    %143 = vmatpush1.bf16.msra.mxu0 0
    %144 = vmatprep.subr.bf16.mxu0 0
    %145 = vmatpush1.bf16.msra.mxu0 %v128
    %146 = vmatprep.subr.bf16.mxu0 0
    %147 = vmatpush2.bf16.msra.mxu0 0
    %148 = vmatprep.subr.bf16.mxu0 0
    %149 = vmatpush2.bf16.msra.mxu0 0
    %150 = vmatprep.subr.bf16.mxu0 0
    %151 = vmatpush2.bf16.msra.mxu0 0
    %152 = vmatprep.subr.bf16.mxu0 0
    %153 = vmatpush2.bf16.msra.mxu0 0
    %154 = vmatprep.subr.bf16.mxu0 0
    %155 = vmatpush2.bf16.msra.mxu0 0
    %156 = vmatprep.subr.bf16.mxu0 0
    %157 = vmatpush2.bf16.msra.mxu0 0
    %158 = vmatprep.subr.bf16.mxu0 0
    %159 = vmatpush2.bf16.msra.mxu0 0
    %160 = vmatprep.subr.bf16.mxu0 0
    %161 = vmatpush2.bf16.msra.mxu0 0
    %162 = vmatprep.mubr.bf16.mxu0 0
    %163 = vmatmul.mubr.bf16.gmra.mxu0 %v124
    %v164 = vpop.f32.mrf.mxu0
    %v165 = vadd.f32 %v110, %v164
    %v166 = vpop.f32.mrf.mxu0
    %v167 = vpop.f32.mrf.mxu0
    %v168 = vadd.f32 %v115, %v167
    %v169 = vpop.f32.mrf.mxu0
    %170 = vdwg.mxu0
    %v171 = vmax.f32 %v165, 0.0
    %v172 = vmax.f32 %v168, 0.0
    %v173 = vld [vmem:[%s5] sm:$0x1]
    %v174 = vpack.c.bf16 %v172, %v171
    %v175 = vld [vmem:[#allocation2] sm:$0x1]
    %177 = vset.pattern.permute.xlu0 0
    %178 = vperm.xlu0 %177, %v175
    %v179 = vpop.permute.xlu0 %178
    %v181 = vlaneseq
    %v182 = vshrl.u32 %v181, 7
    %v183 = vsub.s32 0, %v182
    %v184 = vrot.slane %v179, %v183
    %v186 = vsel %vm122, %v173, 0
    %v189 = vsel %vm126, %v174, 0
    %191 = vmatprep.subr.bf16.mxu0 0
    %192 = vmatpush1.bf16.msra.mxu0 0
    %193 = vmatprep.subr.bf16.mxu0 0
    %194 = vmatpush1.bf16.msra.mxu0 0
    %195 = vmatprep.subr.bf16.mxu0 0
    %196 = vmatpush1.bf16.msra.mxu0 0
    %197 = vmatprep.subr.bf16.mxu0 0
    %198 = vmatpush1.bf16.msra.mxu0 0
    %199 = vmatprep.subr.bf16.mxu0 0
    %200 = vmatpush1.bf16.msra.mxu0 0
    %201 = vmatprep.subr.bf16.mxu0 0
    %202 = vmatpush1.bf16.msra.mxu0 0
    %203 = vmatprep.subr.bf16.mxu0 0
    %204 = vmatpush1.bf16.msra.mxu0 0
    %205 = vmatprep.subr.bf16.mxu0 0
    %206 = vmatpush1.bf16.msra.mxu0 %v189
    %207 = vmatprep.subr.bf16.mxu0 0
    %208 = vmatpush2.bf16.msra.mxu0 0
    %209 = vmatprep.subr.bf16.mxu0 0
    %210 = vmatpush2.bf16.msra.mxu0 0
    %211 = vmatprep.subr.bf16.mxu0 0
    %212 = vmatpush2.bf16.msra.mxu0 0
    %213 = vmatprep.subr.bf16.mxu0 0
    %214 = vmatpush2.bf16.msra.mxu0 0
    %215 = vmatprep.subr.bf16.mxu0 0
    %216 = vmatpush2.bf16.msra.mxu0 0
    %217 = vmatprep.subr.bf16.mxu0 0
    %218 = vmatpush2.bf16.msra.mxu0 0
    %219 = vmatprep.subr.bf16.mxu0 0
    %220 = vmatpush2.bf16.msra.mxu0 0
    %221 = vmatprep.subr.bf16.mxu0 0
    %222 = vmatpush2.bf16.msra.mxu0 0
    %223 = vmatprep.mubr.bf16.mxu0 0
    %224 = vmatmul.mubr.bf16.gmra.mxu0 %v186
    %v225 = vpop.f32.mrf.mxu0
    %v226 = vadd.f32 %v184, %v225
    %v227 = vpop.f32.mrf.mxu0
    %v228 = vpop.f32.mrf.mxu0
    %v229 = vpop.f32.mrf.mxu0
    %230 = vdwg.mxu0
    %v231 = vmax.f32 %v226, 0.0
    %232 = vst [vmem:[#allocation3] sm:$0x1] %v231
    // Predicated region
    $region30: #{tpu_custom_call.1} parent=1 // pred_check
      _
    $region31: #{tpu_custom_call.1} parent=1 // pred_check_branch
      %234 = sbr.rel (0) target = $region33
    $region32: #{tpu_custom_call.1} parent=1 // pred_region
      %s236 = ssub.s32 16, 16
      %237 = vsyncadd [#allocation4], %s236
      %s239 = sshll.u32 [#allocation3], 4
      %s240 = int_to_ptr.vmem [resolvable:$true] %s239
      %242 = dma.vmem_to_hbm [thread:$0]  %s240, 16, %s7, [#allocation4]
    $region33: #{tpu_custom_call.1} parent=1 // pred_fallthru
      _
    // Predicated region
    $region34: #{tpu_custom_call.1} parent=1 // pred_check
      _
    $region35: #{tpu_custom_call.1} parent=1 // pred_check_branch
      %244 = sbr.rel (0) target = $region37
    $region36: #{tpu_custom_call.1} parent=1 // pred_region
      %245 = dma.done [#allocation4], 16
    $region37: #{tpu_custom_call.1} parent=1 // pred_fallthru
      _
    %246 = vsyncpa [#allocation4], 1

</llo_original>
